<compile_context>
chip_gen: v7x
topology: tpu7x:2x2x1
jax: 0.10.0
libtpu: 0.0.40
codegen_flags: <defaults>
</compile_context>

<pallas_src>
import math
import functools

import jax
import jax.numpy as jnp
from jax.experimental import pallas as pl
from jax.experimental.pallas import tpu as pltpu


def _interaction_kernel(x_ref, w_ref, o_ref, *, batch_tile, dim, n_head,
                        key_size, value_size, scale, residual):
    # x_ref: (batch_tile*dim, emb)            one tile of flattened (batch, field) rows
    # w_ref: (emb, Ctot)                      q|k|v|(r) projections, all heads (VMEM-resident)
    # o_ref: (batch_tile*dim, n_head*value)   head-major output columns
    x = x_ref[...]
    w = w_ref[...]

    # Single lane-dense projection for q/k/v/(residual) of every head at once.
    # Operands stay in their native dtype (bf16-friendly); accumulate in f32.
    y = jnp.dot(x, w, preferred_element_type=jnp.float32)   # (M, Ctot) f32

    hk = n_head * key_size
    hv = n_head * value_size
    off_q, off_k, off_v, off_r = 0, hk, 2 * hk, 2 * hk + hv

    outs = []
    for h in range(n_head):  # n_head is small & static -> unrolled
        qh = y[:, off_q + h * key_size: off_q + (h + 1) * key_size]
        kh = y[:, off_k + h * key_size: off_k + (h + 1) * key_size]
        vh = y[:, off_v + h * value_size: off_v + (h + 1) * value_size]
        qh = qh.reshape(batch_tile, dim, key_size)
        kh = kh.reshape(batch_tile, dim, key_size)
        vh = vh.reshape(batch_tile, dim, value_size)

        # Scaled dot-product attention over the field axis (batched over the
        # batch tile; contraction on the last dims -> no explicit k transpose).
        s = jnp.einsum('bik,bjk->bij', qh, kh,
                       preferred_element_type=jnp.float32) * scale
        s = s - jnp.max(s, axis=-1, keepdims=True)
        p = jnp.exp(s)
        p = p * pl.reciprocal(jnp.sum(p, axis=-1, keepdims=True), approx=True)

        oh = jnp.einsum('bij,bjd->bid', p, vh,
                        preferred_element_type=jnp.float32)
        if residual:
            rh = y[:, off_r + h * value_size: off_r + (h + 1) * value_size]
            oh = oh + rh.reshape(batch_tile, dim, value_size)
        outs.append(oh)

    out = jnp.concatenate(outs, axis=-1) if n_head > 1 else outs[0]
    o_ref[...] = out.reshape(batch_tile * dim, hv).astype(o_ref.dtype)


def interaction_forward(x, wq, wk, wv, wr=None, *, n_head, key_size, value_size,
                        residual=True, batch_tile=None):
    """x: (B, dim, emb). w*: PyTorch nn.Linear weights, shape (out, emb).
       Returns (B, n_head, dim, value_size) matching Interaction.forward."""
    B, dim, emb = x.shape
    hv = n_head * value_size

    # Concatenate all projections into one lane-dense weight (emb, Ctot).
    # nn.Linear output columns are already head-major (.view(..., n_head, hd)).
    parts = [wq.T, wk.T, wv.T]
    if residual:
        parts.append(wr.T)
    w_all = jnp.concatenate(parts, axis=1).astype(x.dtype)     # (emb, Ctot)
    ctot = w_all.shape[1]

    # Choose a batch tile: divisor of B, aiming for >=256 rows per block.
    if batch_tile is None:
        target = max(1, 256 // max(dim, 1))
        batch_tile = B
        for d in range(min(B, target), 0, -1):
            if B % d == 0:
                batch_tile = d
                break
    if (batch_tile * dim) % 8 != 0:   # keep the (8, 128) block constraint safe
        batch_tile = B
    assert B % batch_tile == 0
    num_tiles = B // batch_tile
    m_tile = batch_tile * dim

    x2 = x.reshape(B * dim, emb)
    scale = 1.0 / math.sqrt(key_size)

    kernel = functools.partial(
        _interaction_kernel, batch_tile=batch_tile, dim=dim, n_head=n_head,
        key_size=key_size, value_size=value_size, scale=scale, residual=residual)

    out2 = pl.pallas_call(
        kernel,
        out_shape=jax.ShapeDtypeStruct((B * dim, hv), x.dtype),
        grid_spec=pltpu.PrefetchScalarGridSpec(
            num_scalar_prefetch=0,
            grid=(num_tiles,),
            in_specs=[
                pl.BlockSpec((m_tile, emb), lambda i: (i, 0)),   # streamed x tile
                pl.BlockSpec((emb, ctot), lambda i: (0, 0)),     # resident weights
            ],
            out_specs=pl.BlockSpec((m_tile, hv), lambda i: (i, 0)),
        ),
        compiler_params=pltpu.CompilerParams(
            dimension_semantics=("parallel",)),
    )(x2, w_all)

    # (B*dim, H*val) -> (B, dim, H, val) -> (B, H, dim, val)
    return jnp.transpose(out2.reshape(B, dim, n_head, value_size), (0, 2, 1, 3))


def interaction_reference(x, wq, wk, wv, wr=None, *, n_head, key_size,
                          value_size, residual=True):
    """Pure-JAX reference replicating the PyTorch forward exactly."""
    B, dim, emb = x.shape
    xf = x.astype(jnp.float32)

    def lin(w):  # nn.Linear, no bias
        return xf @ w.T.astype(jnp.float32)

    def split_heads(y, hd):
        return jnp.transpose(y.reshape(B, dim, n_head, hd), (0, 2, 1, 3))

    q = split_heads(lin(wq), key_size)
    k = split_heads(lin(wk), key_size)
    v = split_heads(lin(wv), value_size)
    s = jnp.einsum("bhik,bhjk->bhij", q, k) / math.sqrt(key_size)
    p = jax.nn.softmax(s, axis=-1)
    res = jnp.einsum("bhij,bhjd->bhid", p, v)
    if residual:
        res = res + split_heads(lin(wr), value_size)
    return res.astype(x.dtype)


if __name__ == "__main__":
    def run_case(B, DIM, EMB, N_HEAD, KEY, VAL, residual):
        key = jax.random.PRNGKey(0)
        kx, kq, kk, kv, kr = jax.random.split(key, 5)
        x = jax.random.normal(kx, (B, DIM, EMB), dtype=jnp.float32)
        bound = 1.0 / math.sqrt(EMB)  # nn.Linear default init range
        wq = jax.random.uniform(kq, (KEY * N_HEAD, EMB), jnp.float32, -bound, bound)
        wk = jax.random.uniform(kk, (KEY * N_HEAD, EMB), jnp.float32, -bound, bound)
        wv = jax.random.uniform(kv, (VAL * N_HEAD, EMB), jnp.float32, -bound, bound)
        wr = (jax.random.uniform(kr, (VAL * N_HEAD, EMB), jnp.float32, -bound, bound)
              if residual else None)

        out = interaction_forward(x, wq, wk, wv, wr, n_head=N_HEAD,
                                  key_size=KEY, value_size=VAL, residual=residual)
        out = jax.block_until_ready(out)
        ref = interaction_reference(x, wq, wk, wv, wr, n_head=N_HEAD,
                                    key_size=KEY, value_size=VAL, residual=residual)
        assert out.shape == (B, N_HEAD, DIM, VAL), out.shape
        # approx reciprocal in the softmax adds ~1e-3 relative error
        assert jnp.allclose(out, ref, atol=1e-2, rtol=1e-2), \
            float(jnp.max(jnp.abs(out - ref)))

    # Small config consistent with AutoInt: batch=2, n_fields=8, emb=32,
    # n_head=2, key=val=16 (residual on).
    run_case(B=2, DIM=8, EMB=32, N_HEAD=2, KEY=16, VAL=16, residual=True)
    # Batch-blocked multi-step grid path (2 tiles of 256 rows) + residual=False branch.
    run_case(B=64, DIM=8, EMB=32, N_HEAD=2, KEY=16, VAL=16, residual=False)

    print("KERNEL_OK")
</pallas_src>

<mosaic_0001>
module attributes {stable_mosaic.version = 11 : i64} {
  func.func @_interaction_kernel(%arg0: i32, %arg1: memref<16x32xf32, #tpu.memory_space<vmem>>, %arg2: memref<32x128xf32, #tpu.memory_space<vmem>>, %arg3: memref<16x32xf32, #tpu.memory_space<vmem>>) attributes {dimension_semantics = [#tpu.dimension_semantics<parallel>], iteration_bounds = array<i64: 1>, scalar_prefetch = 0 : i64, scratch_operands = 0 : i64, tpu.core_type = #tpu.core_type<tc>, window_params = [{transform_indices = @transform_0, window_bounds = array<i64: 16, 32>}, {pipeline_mode = #tpu.pipeline_mode<synchronous>, transform_indices = @transform_1, window_bounds = array<i64: 32, 128>}, {transform_indices = @transform_2, window_bounds = array<i64: 16, 32>}]} {
    %c0 = arith.constant 0 : index
    %c0_0 = arith.constant 0 : index
    %0 = vector.load %arg1[%c0, %c0_0] : memref<16x32xf32, #tpu.memory_space<vmem>>, vector<16x32xf32>
    %c0_1 = arith.constant 0 : index
    %c0_2 = arith.constant 0 : index
    %1 = vector.load %arg2[%c0_1, %c0_2] : memref<32x128xf32, #tpu.memory_space<vmem>>, vector<32x128xf32>
    %cst = arith.constant dense<0.000000e+00> : vector<16x128xf32>
    %2 = tpu.matmul %0, %1, %cst {dimension_numbers = #tpu.dot_dimension_numbers<[1], [0], [0], [1], [0, 0, 1, 1], [], []>} : vector<16x32xf32>, vector<32x128xf32>, vector<16x128xf32> -> vector<16x128xf32>
    %3 = vector.extract_strided_slice %2 {offsets = [0, 0], sizes = [16, 16], strides = [1, 1]} : vector<16x128xf32> to vector<16x16xf32>
    %4 = vector.extract_strided_slice %2 {offsets = [0, 32], sizes = [16, 16], strides = [1, 1]} : vector<16x128xf32> to vector<16x16xf32>
    %5 = vector.extract_strided_slice %2 {offsets = [0, 64], sizes = [16, 16], strides = [1, 1]} : vector<16x128xf32> to vector<16x16xf32>
    %6 = vector.shape_cast %3 : vector<16x16xf32> to vector<2x8x16xf32>
    %7 = vector.shape_cast %4 : vector<16x16xf32> to vector<2x8x16xf32>
    %8 = vector.shape_cast %5 : vector<16x16xf32> to vector<2x8x16xf32>
    "tpu.trace_start"() <{level = 10 : i32, message = "bik,bjk->bij"}> : () -> ()
    %cst_3 = arith.constant dense<0.000000e+00> : vector<2x8x8xf32>
    %9 = tpu.matmul %6, %7, %cst_3 {dimension_numbers = #tpu.dot_dimension_numbers<[2], [2], [1], [1], [0, 0, 0, 1, 1, 1], [0], [0]>} : vector<2x8x16xf32>, vector<2x8x16xf32>, vector<2x8x8xf32> -> vector<2x8x8xf32>
    "tpu.trace_stop"() : () -> ()
    %cst_4 = arith.constant 2.500000e-01 : f32
    %10 = vector.broadcast %cst_4 : f32 to vector<2x8x8xf32>
    %11 = arith.mulf %9, %10 : vector<2x8x8xf32>
    %cst_5 = arith.constant dense<0xFF800000> : vector<2x8xf32>
    %12 = vector.multi_reduction <maximumf>, %11, %cst_5 [2] : vector<2x8x8xf32> to vector<2x8xf32>
    %13 = vector.shape_cast %12 : vector<2x8xf32> to vector<2x8x1xf32>
    %14 = vector.broadcast %13 : vector<2x8x1xf32> to vector<2x8x8xf32>
    %15 = arith.subf %11, %14 : vector<2x8x8xf32>
    %16 = math.exp %15 : vector<2x8x8xf32>
    %cst_6 = arith.constant dense<0.000000e+00> : vector<2x8xf32>
    %17 = vector.multi_reduction <add>, %16, %cst_6 [2] : vector<2x8x8xf32> to vector<2x8xf32>
    %18 = vector.shape_cast %17 : vector<2x8xf32> to vector<2x8x1xf32>
    %19 = tpu.reciprocal %18 {approx = true} : vector<2x8x1xf32> -> vector<2x8x1xf32>
    %20 = vector.broadcast %19 : vector<2x8x1xf32> to vector<2x8x8xf32>
    %21 = arith.mulf %16, %20 : vector<2x8x8xf32>
    "tpu.trace_start"() <{level = 10 : i32, message = "bij,bjd->bid"}> : () -> ()
    %cst_7 = arith.constant dense<0.000000e+00> : vector<2x8x16xf32>
    %22 = tpu.matmul %21, %8, %cst_7 {dimension_numbers = #tpu.dot_dimension_numbers<[2], [1], [1], [2], [0, 0, 0, 1, 1, 2], [0], [0]>} : vector<2x8x8xf32>, vector<2x8x16xf32>, vector<2x8x16xf32> -> vector<2x8x16xf32>
    "tpu.trace_stop"() : () -> ()
    %23 = vector.extract_strided_slice %2 {offsets = [0, 96], sizes = [16, 16], strides = [1, 1]} : vector<16x128xf32> to vector<16x16xf32>
    %24 = vector.shape_cast %23 : vector<16x16xf32> to vector<2x8x16xf32>
    %25 = arith.addf %22, %24 : vector<2x8x16xf32>
    %26 = vector.extract_strided_slice %2 {offsets = [0, 16], sizes = [16, 16], strides = [1, 1]} : vector<16x128xf32> to vector<16x16xf32>
    %27 = vector.extract_strided_slice %2 {offsets = [0, 48], sizes = [16, 16], strides = [1, 1]} : vector<16x128xf32> to vector<16x16xf32>
    %28 = vector.extract_strided_slice %2 {offsets = [0, 80], sizes = [16, 16], strides = [1, 1]} : vector<16x128xf32> to vector<16x16xf32>
    %29 = vector.shape_cast %26 : vector<16x16xf32> to vector<2x8x16xf32>
    %30 = vector.shape_cast %27 : vector<16x16xf32> to vector<2x8x16xf32>
    %31 = vector.shape_cast %28 : vector<16x16xf32> to vector<2x8x16xf32>
    "tpu.trace_start"() <{level = 10 : i32, message = "bik,bjk->bij"}> : () -> ()
    %cst_8 = arith.constant dense<0.000000e+00> : vector<2x8x8xf32>
    %32 = tpu.matmul %29, %30, %cst_8 {dimension_numbers = #tpu.dot_dimension_numbers<[2], [2], [1], [1], [0, 0, 0, 1, 1, 1], [0], [0]>} : vector<2x8x16xf32>, vector<2x8x16xf32>, vector<2x8x8xf32> -> vector<2x8x8xf32>
    "tpu.trace_stop"() : () -> ()
    %cst_9 = arith.constant 2.500000e-01 : f32
    %33 = vector.broadcast %cst_9 : f32 to vector<2x8x8xf32>
    %34 = arith.mulf %32, %33 : vector<2x8x8xf32>
    %cst_10 = arith.constant dense<0xFF800000> : vector<2x8xf32>
    %35 = vector.multi_reduction <maximumf>, %34, %cst_10 [2] : vector<2x8x8xf32> to vector<2x8xf32>
    %36 = vector.shape_cast %35 : vector<2x8xf32> to vector<2x8x1xf32>
    %37 = vector.broadcast %36 : vector<2x8x1xf32> to vector<2x8x8xf32>
    %38 = arith.subf %34, %37 : vector<2x8x8xf32>
    %39 = math.exp %38 : vector<2x8x8xf32>
    %cst_11 = arith.constant dense<0.000000e+00> : vector<2x8xf32>
    %40 = vector.multi_reduction <add>, %39, %cst_11 [2] : vector<2x8x8xf32> to vector<2x8xf32>
    %41 = vector.shape_cast %40 : vector<2x8xf32> to vector<2x8x1xf32>
    %42 = tpu.reciprocal %41 {approx = true} : vector<2x8x1xf32> -> vector<2x8x1xf32>
    %43 = vector.broadcast %42 : vector<2x8x1xf32> to vector<2x8x8xf32>
    %44 = arith.mulf %39, %43 : vector<2x8x8xf32>
    "tpu.trace_start"() <{level = 10 : i32, message = "bij,bjd->bid"}> : () -> ()
    %cst_12 = arith.constant dense<0.000000e+00> : vector<2x8x16xf32>
    %45 = tpu.matmul %44, %31, %cst_12 {dimension_numbers = #tpu.dot_dimension_numbers<[2], [1], [1], [2], [0, 0, 0, 1, 1, 2], [0], [0]>} : vector<2x8x8xf32>, vector<2x8x16xf32>, vector<2x8x16xf32> -> vector<2x8x16xf32>
    "tpu.trace_stop"() : () -> ()
    %46 = vector.extract_strided_slice %2 {offsets = [0, 112], sizes = [16, 16], strides = [1, 1]} : vector<16x128xf32> to vector<16x16xf32>
    %47 = vector.shape_cast %46 : vector<16x16xf32> to vector<2x8x16xf32>
    %48 = arith.addf %45, %47 : vector<2x8x16xf32>
    %49 = tpu.concatenate %25, %48 in 2 : vector<2x8x16xf32>, vector<2x8x16xf32> -> vector<2x8x32xf32>
    %50 = vector.shape_cast %49 : vector<2x8x32xf32> to vector<16x32xf32>
    %c0_13 = arith.constant 0 : index
    %c0_14 = arith.constant 0 : index
    %51 = vector.load %arg3[%c0_13, %c0_14] : memref<16x32xf32, #tpu.memory_space<vmem>>, vector<16x32xf32>
    tpu.vector_store %arg3[%c0_13, %c0_14], %50 {strides = array<i32>} : memref<16x32xf32, #tpu.memory_space<vmem>>, vector<16x32xf32>,
    return
  }
  func.func @transform_0(%arg0: i32) -> (i32, i32) {
    %c0_i32 = arith.constant 0 : i32
    %c0_i32_0 = arith.constant 0 : i32
    return %arg0, %c0_i32 : i32, i32
  }
  func.func @transform_1(%arg0: i32) -> (i32, i32) {
    %c0_i32 = arith.constant 0 : i32
    %c0_i32_0 = arith.constant 0 : i32
    %c0_i32_1 = arith.constant 0 : i32
    return %c0_i32, %c0_i32_0 : i32, i32
  }
  func.func @transform_2(%arg0: i32) -> (i32, i32) {
    %c0_i32 = arith.constant 0 : i32
    %c0_i32_0 = arith.constant 0 : i32
    return %arg0, %c0_i32 : i32, i32
  }
}

</mosaic_0001>

<llo_original>
// kernel: tpu_custom_call.1
$region0: #{tpu_custom_call.1}
  #allocation0 [shape = 'u32[]', space=smem, size = 0x4, offset = 0x4, fixed_abs, tag = 'smem constant byte address 0x4 - core index']
  #allocation1 [shape = 'u32[144,128]{1,0:T(1,128)}', space=vmem, size = 0x12000, scoped, tag = 'internal scratch']
  %s0 = inlined_call_operand.hbm [shape: f32[16,32], index: 0, kind: input, shape index: {}]
  %s1 = inlined_call_operand.hbm [shape: f32[32,128], index: 1, kind: input, shape index: {}]
  %s2 = inlined_call_operand.hbm [shape: f32[16,32], index: 2, kind: output, shape index: {}]
  %s3 = sld [smem:[#allocation0]]
  $region26: #{tpu_custom_call.1} parent=0
    _
  %s5 = ssub.s32 1, %s3
  %s6 = scalar_select 0, %s5, %s3
  $region1: #{tpu_custom_call.1} parent=0
    #allocation2 [shape = 'u8[8192]{0}', space=vmem, size = 0x2000, scoped, tag = 'input window, operand 0, single buffered']
    #allocation3 [shape = 's32[1]{0}', space=sflag, size = 0x4, scoped, tag = 'scoped memory for tpu_custom_call.1']
    #allocation4 [shape = 's32[1]{0}', space=sflag, size = 0x4, scoped, tag = 'scoped memory for tpu_custom_call.1']
    #allocation5 [shape = 'u8[16384]{0}', space=vmem, size = 0x4000, scoped, tag = 'input window, operand 1, single buffered']
    #allocation6 [shape = 's32[1]{0}', space=sflag, size = 0x4, scoped, tag = 'scoped memory for tpu_custom_call.1']
    #allocation7 [shape = 'u8[8192]{0}', space=vmem, size = 0x2000, scoped, tag = 'output window, operand 0, single buffered']
    %7 = vsyncpa [#allocation3], 0
    %8 = vsyncpa [#allocation6], 0
    %9 = vsyncpa [#allocation4], 0
    // Predicated region
    $region2: #{tpu_custom_call.1} parent=1 // pred_check
      _
    $region3: #{tpu_custom_call.1} parent=1 // pred_check_branch
      %11 = sbr.rel (0) target = $region5
    $region4: #{tpu_custom_call.1} parent=1 // pred_region
      %s13 = ssub.s32 256, 256
      %14 = vsyncadd [#allocation3], %s13
      %s15 = sshll.u32 [#allocation2], 4
      %s16 = int_to_ptr.vmem [resolvable:$true] %s15
      %21 = dma.hbm_to_vmem [thread:$0]  %s0, 256, %s16, [#allocation3], 128, 128, 8
    $region5: #{tpu_custom_call.1} parent=1 // pred_fallthru
      _
    // Predicated region
    $region6: #{tpu_custom_call.1} parent=1 // pred_check
      _
    $region7: #{tpu_custom_call.1} parent=1 // pred_check_branch
      %23 = sbr.rel (0) target = $region9
    $region8: #{tpu_custom_call.1} parent=1 // pred_region
      %s25 = ssub.s32 512, 512
      %26 = vsyncadd [#allocation6], %s25
      %s27 = sshll.u32 [#allocation5], 4
      %s28 = int_to_ptr.vmem [resolvable:$true] %s27
      %33 = dma.hbm_to_vmem [thread:$0]  %s1, 512, %s28, [#allocation6], 128, 128, 8
    $region9: #{tpu_custom_call.1} parent=1 // pred_fallthru
      _
    // Predicated region
    $region10: #{tpu_custom_call.1} parent=1 // pred_check
      _
    $region11: #{tpu_custom_call.1} parent=1 // pred_check_branch
      %35 = sbr.rel (0) target = $region13
    $region12: #{tpu_custom_call.1} parent=1 // pred_region
      %36 = dma.done [#allocation3], 256
    $region13: #{tpu_custom_call.1} parent=1 // pred_fallthru
      _
    // Predicated region
    $region14: #{tpu_custom_call.1} parent=1 // pred_check
      _
    $region15: #{tpu_custom_call.1} parent=1 // pred_check_branch
      %38 = sbr.rel (0) target = $region17
    $region16: #{tpu_custom_call.1} parent=1 // pred_region
      %39 = dma.done [#allocation6], 512
    $region17: #{tpu_custom_call.1} parent=1 // pred_fallthru
      _
    %v40 = vld [vmem:[#allocation2] sm:$0xff]
    %v41 = vld [vmem:[#allocation2 + $0x8] sm:$0xff]
    %v42 = vld [vmem:[#allocation5] sm:$0xff]
    %v43 = vld [vmem:[#allocation5 + $0x8] sm:$0xff]
    %v44 = vld [vmem:[#allocation5 + $0x10] sm:$0xff]
    %v45 = vld [vmem:[#allocation5 + $0x18] sm:$0xff]
    %vm46 = vcmask 261120
    %v48 = vsel %vm46, %v40, 0
    %v51 = vsel %vm46, %v41, 0
    %53 = vmatprep.subr.mxu0 0.0
    %54 = vmatpush1.msra.mxu0 %v42
    %55 = vmatprep.subr.mxu0 0.0
    %56 = vmatpush1.msra.mxu0 %v43
    %57 = vmatprep.subr.mxu0 0.0
    %58 = vmatpush1.msra.mxu0 %v44
    %59 = vmatprep.subr.mxu0 0.0
    %60 = vmatpush1.msra.mxu0 %v45
    %61 = vmatprep.subr.mxu0 0.0
    %62 = vmatpush1.msra.mxu0 0.0
    %63 = vmatprep.subr.mxu0 0.0
    %64 = vmatpush1.msra.mxu0 0.0
    %65 = vmatprep.subr.mxu0 0.0
    %66 = vmatpush1.msra.mxu0 0.0
    %67 = vmatprep.subr.mxu0 0.0
    %68 = vmatpush1.msra.mxu0 0.0
    %69 = vmatprep.subr.mxu0 0.0
    %70 = vmatpush1.msra.mxu0 0.0
    %71 = vmatprep.subr.mxu0 0.0
    %72 = vmatpush1.msra.mxu0 0.0
    %73 = vmatprep.subr.mxu0 0.0
    %74 = vmatpush1.msra.mxu0 0.0
    %75 = vmatprep.subr.mxu0 0.0
    %76 = vmatpush1.msra.mxu0 0.0
    %77 = vmatprep.subr.mxu0 0.0
    %78 = vmatpush1.msra.mxu0 0.0
    %79 = vmatprep.subr.mxu0 0.0
    %80 = vmatpush1.msra.mxu0 0.0
    %81 = vmatprep.subr.mxu0 0.0
    %82 = vmatpush1.msra.mxu0 0.0
    %83 = vmatprep.subr.mxu0 0.0
    %84 = vmatpush1.msra.mxu0 0.0
    %85 = vmatprep.subr.mxu0 0.0
    %86 = vmatpush1.msra.mxu0 0.0
    %87 = vmatprep.subr.mxu0 0.0
    %88 = vmatpush1.msra.mxu0 0.0
    %89 = vmatprep.subr.mxu0 0.0
    %90 = vmatpush1.msra.mxu0 0.0
    %91 = vmatprep.subr.mxu0 0.0
    %92 = vmatpush1.msra.mxu0 0.0
    %93 = vmatprep.subr.mxu0 0.0
    %94 = vmatpush1.msra.mxu0 0.0
    %95 = vmatprep.subr.mxu0 0.0
    %96 = vmatpush1.msra.mxu0 0.0
    %97 = vmatprep.subr.mxu0 0.0
    %98 = vmatpush1.msra.mxu0 0.0
    %99 = vmatprep.subr.mxu0 0.0
    %100 = vmatpush1.msra.mxu0 0.0
    %101 = vmatprep.subr.mxu0 0.0
    %102 = vmatpush1.msra.mxu0 0.0
    %103 = vmatprep.subr.mxu0 0.0
    %104 = vmatpush1.msra.mxu0 0.0
    %105 = vmatprep.subr.mxu0 0.0
    %106 = vmatpush1.msra.mxu0 0.0
    %107 = vmatprep.subr.mxu0 0.0
    %108 = vmatpush1.msra.mxu0 0.0
    %109 = vmatprep.subr.mxu0 0.0
    %110 = vmatpush1.msra.mxu0 0.0
    %111 = vmatprep.subr.mxu0 0.0
    %112 = vmatpush1.msra.mxu0 0.0
    %113 = vmatprep.subr.mxu0 0.0
    %114 = vmatpush1.msra.mxu0 0.0
    %115 = vmatprep.subr.mxu0 0.0
    %116 = vmatpush1.msra.mxu0 0.0
    %117 = vmatprep.mubr.f32.mxu0 0.0
    %118 = vmatmul.mubr.f32.gmra.mrb[0].mxu0 %v48
    %v119 = vpop.f32.mrb[0].mxu0
    %v120 = vadd.f32 0.0, %v119
    %v121 = vpop.f32.mrb[0].mxu0
    %122 = vmatprep.mubr.f32.mxu0 0.0
    %123 = vmatmul.mubr.f32.gmra.mrb[0].mxu0 %v51
    %v124 = vpop.f32.mrb[0].mxu0
    %v125 = vadd.f32 0.0, %v124
    %v126 = vpop.f32.mrb[0].mxu0
    %127 = vdwg.mxu0
    %129 = vrot.lane.b32.xlu0 %v120, 96
    %v130 = vpop.permute.xlu0 %129
    %vm131 = vcmask 130048
    %v132 = vsel %vm131, %v120, 0
    %v134 = vsel %vm131, %v130, 0
    %136 = vmatprep.subr.mxu0 0.0
    %137 = vmatpush1.xpose.msra.mxu0 %v134
    %138 = vmatprep.subr.mxu0 0.0
    %139 = vmatpush1.xpose.msra.mxu0 0.0
    %140 = vmatprep.subr.mxu0 0.0
    %141 = vmatpush1.xpose.msra.mxu0 0.0
    %142 = vmatprep.subr.mxu0 0.0
    %143 = vmatpush1.xpose.msra.mxu0 0.0
    %144 = vmatprep.subr.mxu0 0.0
    %145 = vmatpush1.xpose.msra.mxu0 0.0
    %146 = vmatprep.subr.mxu0 0.0
    %147 = vmatpush1.xpose.msra.mxu0 0.0
    %148 = vmatprep.subr.mxu0 0.0
    %149 = vmatpush1.xpose.msra.mxu0 0.0
    %150 = vmatprep.subr.mxu0 0.0
    %151 = vmatpush1.xpose.msra.mxu0 0.0
    %152 = vmatprep.subr.mxu0 0.0
    %153 = vmatpush1.xpose.msra.mxu0 0.0
    %154 = vmatprep.subr.mxu0 0.0
    %155 = vmatpush1.xpose.msra.mxu0 0.0
    %156 = vmatprep.subr.mxu0 0.0
    %157 = vmatpush1.xpose.msra.mxu0 0.0
    %158 = vmatprep.subr.mxu0 0.0
    %159 = vmatpush1.xpose.msra.mxu0 0.0
    %160 = vmatprep.subr.mxu0 0.0
    %161 = vmatpush1.xpose.msra.mxu0 0.0
    %162 = vmatprep.subr.mxu0 0.0
    %163 = vmatpush1.xpose.msra.mxu0 0.0
    %164 = vmatprep.subr.mxu0 0.0
    %165 = vmatpush1.xpose.msra.mxu0 0.0
    %166 = vmatprep.subr.mxu0 0.0
    %167 = vmatpush1.xpose.msra.mxu0 0.0
    %168 = vmatprep.subr.mxu0 0.0
    %169 = vmatpush1.xpose.msra.mxu0 0.0
    %170 = vmatprep.subr.mxu0 0.0
    %171 = vmatpush1.xpose.msra.mxu0 0.0
    %172 = vmatprep.subr.mxu0 0.0
    %173 = vmatpush1.xpose.msra.mxu0 0.0
    %174 = vmatprep.subr.mxu0 0.0
    %175 = vmatpush1.xpose.msra.mxu0 0.0
    %176 = vmatprep.subr.mxu0 0.0
    %177 = vmatpush1.xpose.msra.mxu0 0.0
    %178 = vmatprep.subr.mxu0 0.0
    %179 = vmatpush1.xpose.msra.mxu0 0.0
    %180 = vmatprep.subr.mxu0 0.0
    %181 = vmatpush1.xpose.msra.mxu0 0.0
    %182 = vmatprep.subr.mxu0 0.0
    %183 = vmatpush1.xpose.msra.mxu0 0.0
    %184 = vmatprep.subr.mxu0 0.0
    %185 = vmatpush1.xpose.msra.mxu0 0.0
    %186 = vmatprep.subr.mxu0 0.0
    %187 = vmatpush1.xpose.msra.mxu0 0.0
    %188 = vmatprep.subr.mxu0 0.0
    %189 = vmatpush1.xpose.msra.mxu0 0.0
    %190 = vmatprep.subr.mxu0 0.0
    %191 = vmatpush1.xpose.msra.mxu0 0.0
    %192 = vmatprep.subr.mxu0 0.0
    %193 = vmatpush1.xpose.msra.mxu0 0.0
    %194 = vmatprep.subr.mxu0 0.0
    %195 = vmatpush1.xpose.msra.mxu0 0.0
    %196 = vmatprep.subr.mxu0 0.0
    %197 = vmatpush1.xpose.msra.mxu0 0.0
    %198 = vmatprep.subr.mxu0 0.0
    %199 = vmatpush1.xpose.msra.mxu0 0.0
    %200 = vmatprep.mubr.f32.mxu0 0.0
    %201 = vmatmul.mubr.f32.gmra.mrb[0].mxu0 %v132
    %v202 = vpop.f32.mrb[0].mxu0
    %v203 = vadd.f32 0.0, %v202
    %v204 = vpop.f32.mrb[0].mxu0
    %205 = vdwg.mxu0
    %207 = vrot.lane.b32.xlu0 %v125, 96
    %v208 = vpop.permute.xlu0 %207
    %v209 = vsel %vm131, %v125, 0
    %v211 = vsel %vm131, %v208, 0
    %213 = vmatprep.subr.mxu0 0.0
    %214 = vmatpush1.xpose.msra.mxu0 %v211
    %215 = vmatprep.subr.mxu0 0.0
    %216 = vmatpush1.xpose.msra.mxu0 0.0
    %217 = vmatprep.subr.mxu0 0.0
    %218 = vmatpush1.xpose.msra.mxu0 0.0
    %219 = vmatprep.subr.mxu0 0.0
    %220 = vmatpush1.xpose.msra.mxu0 0.0
    %221 = vmatprep.subr.mxu0 0.0
    %222 = vmatpush1.xpose.msra.mxu0 0.0
    %223 = vmatprep.subr.mxu0 0.0
    %224 = vmatpush1.xpose.msra.mxu0 0.0
    %225 = vmatprep.subr.mxu0 0.0
    %226 = vmatpush1.xpose.msra.mxu0 0.0
    %227 = vmatprep.subr.mxu0 0.0
    %228 = vmatpush1.xpose.msra.mxu0 0.0
    %229 = vmatprep.subr.mxu0 0.0
    %230 = vmatpush1.xpose.msra.mxu0 0.0
    %231 = vmatprep.subr.mxu0 0.0
    %232 = vmatpush1.xpose.msra.mxu0 0.0
    %233 = vmatprep.subr.mxu0 0.0
    %234 = vmatpush1.xpose.msra.mxu0 0.0
    %235 = vmatprep.subr.mxu0 0.0
    %236 = vmatpush1.xpose.msra.mxu0 0.0
    %237 = vmatprep.subr.mxu0 0.0
    %238 = vmatpush1.xpose.msra.mxu0 0.0
    %239 = vmatprep.subr.mxu0 0.0
    %240 = vmatpush1.xpose.msra.mxu0 0.0
    %241 = vmatprep.subr.mxu0 0.0
    %242 = vmatpush1.xpose.msra.mxu0 0.0
    %243 = vmatprep.subr.mxu0 0.0
    %244 = vmatpush1.xpose.msra.mxu0 0.0
    %245 = vmatprep.subr.mxu0 0.0
    %246 = vmatpush1.xpose.msra.mxu0 0.0
    %247 = vmatprep.subr.mxu0 0.0
    %248 = vmatpush1.xpose.msra.mxu0 0.0
    %249 = vmatprep.subr.mxu0 0.0
    %250 = vmatpush1.xpose.msra.mxu0 0.0
    %251 = vmatprep.subr.mxu0 0.0
    %252 = vmatpush1.xpose.msra.mxu0 0.0
    %253 = vmatprep.subr.mxu0 0.0
    %254 = vmatpush1.xpose.msra.mxu0 0.0
    %255 = vmatprep.subr.mxu0 0.0
    %256 = vmatpush1.xpose.msra.mxu0 0.0
    %257 = vmatprep.subr.mxu0 0.0
    %258 = vmatpush1.xpose.msra.mxu0 0.0
    %259 = vmatprep.subr.mxu0 0.0
    %260 = vmatpush1.xpose.msra.mxu0 0.0
    %261 = vmatprep.subr.mxu0 0.0
    %262 = vmatpush1.xpose.msra.mxu0 0.0
    %263 = vmatprep.subr.mxu0 0.0
    %264 = vmatpush1.xpose.msra.mxu0 0.0
    %265 = vmatprep.subr.mxu0 0.0
    %266 = vmatpush1.xpose.msra.mxu0 0.0
    %267 = vmatprep.subr.mxu0 0.0
    %268 = vmatpush1.xpose.msra.mxu0 0.0
    %269 = vmatprep.subr.mxu0 0.0
    %270 = vmatpush1.xpose.msra.mxu0 0.0
    %271 = vmatprep.subr.mxu0 0.0
    %272 = vmatpush1.xpose.msra.mxu0 0.0
    %273 = vmatprep.subr.mxu0 0.0
    %274 = vmatpush1.xpose.msra.mxu0 0.0
    %275 = vmatprep.subr.mxu0 0.0
    %276 = vmatpush1.xpose.msra.mxu0 0.0
    %277 = vmatprep.mubr.f32.mxu0 0.0
    %278 = vmatmul.mubr.f32.gmra.mrb[0].mxu0 %v209
    %v279 = vpop.f32.mrb[0].mxu0
    %v280 = vadd.f32 0.0, %v279
    %v281 = vpop.f32.mrb[0].mxu0
    %282 = vdwg.mxu0
    %v283 = vmul.f32 %v203, 0.25
    %v284 = vmul.f32 %v280, 0.25
    %vm285 = vcmask 64512
    %v286 = vsel %vm285, %v283, -inf
    %287 = vmax.xlane.f32.xlu0 %v286
    %v288 = vpop.xlane.xlu0 %287
    %v289 = vsel %vm285, %v284, -inf
    %290 = vmax.xlane.f32.xlu0 %v289
    %v291 = vpop.xlane.xlu0 %290
    %v292 = vsub.f32 %v283, %v288
    %v293 = vsub.f32 %v284, %v291
    %v294 = vmul.f32 %v292, 1.442695
    %v295 = vpow.pop %v294
    %v296 = vmul.f32 %v293, 1.442695
    %v297 = vpow.pop %v296
    %v298 = vsel %vm285, %v295, 0.0
    %299 = vadd.xlane.f32.xlu0 %v298
    %v300 = vpop.xlane.xlu0 %299
    %v301 = vsel %vm285, %v297, 0.0
    %302 = vadd.xlane.f32.xlu0 %v301
    %v303 = vpop.xlane.xlu0 %302
    %v304 = vrcp.pop %v300
    %v305 = vrcp.pop %v303
    %v306 = vmul.f32 %v295, %v304
    %v307 = vmul.f32 %v297, %v305
    %308 = vrot.lane.b32.xlu0 %v120, 64
    %v309 = vpop.permute.xlu0 %308
    %311 = vrot.lane.b32.xlu0 %v120, 32
    %v312 = vpop.permute.xlu0 %311
    %v315 = vsel %vm285, %v306, 0
    %317 = vmatprep.subr.mxu0 0.0
    %318 = vmatpush1.msra.mxu0 %v309
    %319 = vmatprep.subr.mxu0 0.0
    %320 = vmatpush1.msra.mxu0 0.0
    %321 = vmatprep.subr.mxu0 0.0
    %322 = vmatpush1.msra.mxu0 0.0
    %323 = vmatprep.subr.mxu0 0.0
    %324 = vmatpush1.msra.mxu0 0.0
    %325 = vmatprep.subr.mxu0 0.0
    %326 = vmatpush1.msra.mxu0 0.0
    %327 = vmatprep.subr.mxu0 0.0
    %328 = vmatpush1.msra.mxu0 0.0
    %329 = vmatprep.subr.mxu0 0.0
    %330 = vmatpush1.msra.mxu0 0.0
    %331 = vmatprep.subr.mxu0 0.0
    %332 = vmatpush1.msra.mxu0 0.0
    %333 = vmatprep.subr.mxu0 0.0
    %334 = vmatpush1.msra.mxu0 0.0
    %335 = vmatprep.subr.mxu0 0.0
    %336 = vmatpush1.msra.mxu0 0.0
    %337 = vmatprep.subr.mxu0 0.0
    %338 = vmatpush1.msra.mxu0 0.0
    %339 = vmatprep.subr.mxu0 0.0
    %340 = vmatpush1.msra.mxu0 0.0
    %341 = vmatprep.subr.mxu0 0.0
    %342 = vmatpush1.msra.mxu0 0.0
    %343 = vmatprep.subr.mxu0 0.0
    %344 = vmatpush1.msra.mxu0 0.0
    %345 = vmatprep.subr.mxu0 0.0
    %346 = vmatpush1.msra.mxu0 0.0
    %347 = vmatprep.subr.mxu0 0.0
    %348 = vmatpush1.msra.mxu0 0.0
    %349 = vmatprep.subr.mxu0 0.0
    %350 = vmatpush1.msra.mxu0 0.0
    %351 = vmatprep.subr.mxu0 0.0
    %352 = vmatpush1.msra.mxu0 0.0
    %353 = vmatprep.subr.mxu0 0.0
    %354 = vmatpush1.msra.mxu0 0.0
    %355 = vmatprep.subr.mxu0 0.0
    %356 = vmatpush1.msra.mxu0 0.0
    %357 = vmatprep.subr.mxu0 0.0
    %358 = vmatpush1.msra.mxu0 0.0
    %359 = vmatprep.subr.mxu0 0.0
    %360 = vmatpush1.msra.mxu0 0.0
    %361 = vmatprep.subr.mxu0 0.0
    %362 = vmatpush1.msra.mxu0 0.0
    %363 = vmatprep.subr.mxu0 0.0
    %364 = vmatpush1.msra.mxu0 0.0
    %365 = vmatprep.subr.mxu0 0.0
    %366 = vmatpush1.msra.mxu0 0.0
    %367 = vmatprep.subr.mxu0 0.0
    %368 = vmatpush1.msra.mxu0 0.0
    %369 = vmatprep.subr.mxu0 0.0
    %370 = vmatpush1.msra.mxu0 0.0
    %371 = vmatprep.subr.mxu0 0.0
    %372 = vmatpush1.msra.mxu0 0.0
    %373 = vmatprep.subr.mxu0 0.0
    %374 = vmatpush1.msra.mxu0 0.0
    %375 = vmatprep.subr.mxu0 0.0
    %376 = vmatpush1.msra.mxu0 0.0
    %377 = vmatprep.subr.mxu0 0.0
    %378 = vmatpush1.msra.mxu0 0.0
    %379 = vmatprep.subr.mxu0 0.0
    %380 = vmatpush1.msra.mxu0 0.0
    %381 = vmatprep.mubr.f32.mxu0 0.0
    %382 = vmatmul.mubr.f32.gmra.mrb[0].mxu0 %v315
    %v383 = vpop.f32.mrb[0].mxu0
    %v384 = vadd.f32 %v312, %v383
    %v385 = vpop.f32.mrb[0].mxu0
    %386 = vdwg.mxu0
    %387 = vrot.lane.b32.xlu0 %v125, 64
    %v388 = vpop.permute.xlu0 %387
    %390 = vrot.lane.b32.xlu0 %v125, 32
    %v391 = vpop.permute.xlu0 %390
    %v394 = vsel %vm285, %v307, 0
    %396 = vmatprep.subr.mxu0 0.0
    %397 = vmatpush1.msra.mxu0 %v388
    %398 = vmatprep.subr.mxu0 0.0
    %399 = vmatpush1.msra.mxu0 0.0
    %400 = vmatprep.subr.mxu0 0.0
    %401 = vmatpush1.msra.mxu0 0.0
    %402 = vmatprep.subr.mxu0 0.0
    %403 = vmatpush1.msra.mxu0 0.0
    %404 = vmatprep.subr.mxu0 0.0
    %405 = vmatpush1.msra.mxu0 0.0
    %406 = vmatprep.subr.mxu0 0.0
    %407 = vmatpush1.msra.mxu0 0.0
    %408 = vmatprep.subr.mxu0 0.0
    %409 = vmatpush1.msra.mxu0 0.0
    %410 = vmatprep.subr.mxu0 0.0
    %411 = vmatpush1.msra.mxu0 0.0
    %412 = vmatprep.subr.mxu0 0.0
    %413 = vmatpush1.msra.mxu0 0.0
    %414 = vmatprep.subr.mxu0 0.0
    %415 = vmatpush1.msra.mxu0 0.0
    %416 = vmatprep.subr.mxu0 0.0
    %417 = vmatpush1.msra.mxu0 0.0
    %418 = vmatprep.subr.mxu0 0.0
    %419 = vmatpush1.msra.mxu0 0.0
    %420 = vmatprep.subr.mxu0 0.0
    %421 = vmatpush1.msra.mxu0 0.0
    %422 = vmatprep.subr.mxu0 0.0
    %423 = vmatpush1.msra.mxu0 0.0
    %424 = vmatprep.subr.mxu0 0.0
    %425 = vmatpush1.msra.mxu0 0.0
    %426 = vmatprep.subr.mxu0 0.0
    %427 = vmatpush1.msra.mxu0 0.0
    %428 = vmatprep.subr.mxu0 0.0
    %429 = vmatpush1.msra.mxu0 0.0
    %430 = vmatprep.subr.mxu0 0.0
    %431 = vmatpush1.msra.mxu0 0.0
    %432 = vmatprep.subr.mxu0 0.0
    %433 = vmatpush1.msra.mxu0 0.0
    %434 = vmatprep.subr.mxu0 0.0
    %435 = vmatpush1.msra.mxu0 0.0
    %436 = vmatprep.subr.mxu0 0.0
    %437 = vmatpush1.msra.mxu0 0.0
    %438 = vmatprep.subr.mxu0 0.0
    %439 = vmatpush1.msra.mxu0 0.0
    %440 = vmatprep.subr.mxu0 0.0
    %441 = vmatpush1.msra.mxu0 0.0
    %442 = vmatprep.subr.mxu0 0.0
    %443 = vmatpush1.msra.mxu0 0.0
    %444 = vmatprep.subr.mxu0 0.0
    %445 = vmatpush1.msra.mxu0 0.0
    %446 = vmatprep.subr.mxu0 0.0
    %447 = vmatpush1.msra.mxu0 0.0
    %448 = vmatprep.subr.mxu0 0.0
    %449 = vmatpush1.msra.mxu0 0.0
    %450 = vmatprep.subr.mxu0 0.0
    %451 = vmatpush1.msra.mxu0 0.0
    %452 = vmatprep.subr.mxu0 0.0
    %453 = vmatpush1.msra.mxu0 0.0
    %454 = vmatprep.subr.mxu0 0.0
    %455 = vmatpush1.msra.mxu0 0.0
    %456 = vmatprep.subr.mxu0 0.0
    %457 = vmatpush1.msra.mxu0 0.0
    %458 = vmatprep.subr.mxu0 0.0
    %459 = vmatpush1.msra.mxu0 0.0
    %460 = vmatprep.mubr.f32.mxu0 0.0
    %461 = vmatmul.mubr.f32.gmra.mrb[0].mxu0 %v394
    %v462 = vpop.f32.mrb[0].mxu0
    %v463 = vadd.f32 %v391, %v462
    %v464 = vpop.f32.mrb[0].mxu0
    %465 = vdwg.mxu0
    %466 = vrot.lane.b32.xlu0 %v120, 112
    %v467 = vpop.permute.xlu0 %466
    %468 = vrot.lane.b32.xlu0 %v120, 80
    %v469 = vpop.permute.xlu0 %468
    %v470 = vsel %vm131, %v467, 0
    %v472 = vsel %vm131, %v469, 0
    %474 = vmatprep.subr.mxu0 0.0
    %475 = vmatpush1.xpose.msra.mxu0 %v472
    %476 = vmatprep.subr.mxu0 0.0
    %477 = vmatpush1.xpose.msra.mxu0 0.0
    %478 = vmatprep.subr.mxu0 0.0
    %479 = vmatpush1.xpose.msra.mxu0 0.0
    %480 = vmatprep.subr.mxu0 0.0
    %481 = vmatpush1.xpose.msra.mxu0 0.0
    %482 = vmatprep.subr.mxu0 0.0
    %483 = vmatpush1.xpose.msra.mxu0 0.0
    %484 = vmatprep.subr.mxu0 0.0
    %485 = vmatpush1.xpose.msra.mxu0 0.0
    %486 = vmatprep.subr.mxu0 0.0
    %487 = vmatpush1.xpose.msra.mxu0 0.0
    %488 = vmatprep.subr.mxu0 0.0
    %489 = vmatpush1.xpose.msra.mxu0 0.0
    %490 = vmatprep.subr.mxu0 0.0
    %491 = vmatpush1.xpose.msra.mxu0 0.0
    %492 = vmatprep.subr.mxu0 0.0
    %493 = vmatpush1.xpose.msra.mxu0 0.0
    %494 = vmatprep.subr.mxu0 0.0
    %495 = vmatpush1.xpose.msra.mxu0 0.0
    %496 = vmatprep.subr.mxu0 0.0
    %497 = vmatpush1.xpose.msra.mxu0 0.0
    %498 = vmatprep.subr.mxu0 0.0
    %499 = vmatpush1.xpose.msra.mxu0 0.0
    %500 = vmatprep.subr.mxu0 0.0
    %501 = vmatpush1.xpose.msra.mxu0 0.0
    %502 = vmatprep.subr.mxu0 0.0
    %503 = vmatpush1.xpose.msra.mxu0 0.0
    %504 = vmatprep.subr.mxu0 0.0
    %505 = vmatpush1.xpose.msra.mxu0 0.0
    %506 = vmatprep.subr.mxu0 0.0
    %507 = vmatpush1.xpose.msra.mxu0 0.0
    %508 = vmatprep.subr.mxu0 0.0
    %509 = vmatpush1.xpose.msra.mxu0 0.0
    %510 = vmatprep.subr.mxu0 0.0
    %511 = vmatpush1.xpose.msra.mxu0 0.0
    %512 = vmatprep.subr.mxu0 0.0
    %513 = vmatpush1.xpose.msra.mxu0 0.0
    %514 = vmatprep.subr.mxu0 0.0
    %515 = vmatpush1.xpose.msra.mxu0 0.0
    %516 = vmatprep.subr.mxu0 0.0
    %517 = vmatpush1.xpose.msra.mxu0 0.0
    %518 = vmatprep.subr.mxu0 0.0
    %519 = vmatpush1.xpose.msra.mxu0 0.0
    %520 = vmatprep.subr.mxu0 0.0
    %521 = vmatpush1.xpose.msra.mxu0 0.0
    %522 = vmatprep.subr.mxu0 0.0
    %523 = vmatpush1.xpose.msra.mxu0 0.0
    %524 = vmatprep.subr.mxu0 0.0
    %525 = vmatpush1.xpose.msra.mxu0 0.0
    %526 = vmatprep.subr.mxu0 0.0
    %527 = vmatpush1.xpose.msra.mxu0 0.0
    %528 = vmatprep.subr.mxu0 0.0
    %529 = vmatpush1.xpose.msra.mxu0 0.0
    %530 = vmatprep.subr.mxu0 0.0
    %531 = vmatpush1.xpose.msra.mxu0 0.0
    %532 = vmatprep.subr.mxu0 0.0
    %533 = vmatpush1.xpose.msra.mxu0 0.0
    %534 = vmatprep.subr.mxu0 0.0
    %535 = vmatpush1.xpose.msra.mxu0 0.0
    %536 = vmatprep.subr.mxu0 0.0
    %537 = vmatpush1.xpose.msra.mxu0 0.0
    %538 = vmatprep.mubr.f32.mxu0 0.0
    %539 = vmatmul.mubr.f32.gmra.mrb[0].mxu0 %v470
    %v540 = vpop.f32.mrb[0].mxu0
    %v541 = vadd.f32 0.0, %v540
    %v542 = vpop.f32.mrb[0].mxu0
    %543 = vdwg.mxu0
    %544 = vrot.lane.b32.xlu0 %v125, 112
    %v545 = vpop.permute.xlu0 %544
    %546 = vrot.lane.b32.xlu0 %v125, 80
    %v547 = vpop.permute.xlu0 %546
    %v548 = vsel %vm131, %v545, 0
    %v550 = vsel %vm131, %v547, 0
    %552 = vmatprep.subr.mxu0 0.0
    %553 = vmatpush1.xpose.msra.mxu0 %v550
    %554 = vmatprep.subr.mxu0 0.0
    %555 = vmatpush1.xpose.msra.mxu0 0.0
    %556 = vmatprep.subr.mxu0 0.0
    %557 = vmatpush1.xpose.msra.mxu0 0.0
    %558 = vmatprep.subr.mxu0 0.0
    %559 = vmatpush1.xpose.msra.mxu0 0.0
    %560 = vmatprep.subr.mxu0 0.0
    %561 = vmatpush1.xpose.msra.mxu0 0.0
    %562 = vmatprep.subr.mxu0 0.0
    %563 = vmatpush1.xpose.msra.mxu0 0.0
    %564 = vmatprep.subr.mxu0 0.0
    %565 = vmatpush1.xpose.msra.mxu0 0.0
    %566 = vmatprep.subr.mxu0 0.0
    %567 = vmatpush1.xpose.msra.mxu0 0.0
    %568 = vmatprep.subr.mxu0 0.0
    %569 = vmatpush1.xpose.msra.mxu0 0.0
    %570 = vmatprep.subr.mxu0 0.0
    %571 = vmatpush1.xpose.msra.mxu0 0.0
    %572 = vmatprep.subr.mxu0 0.0
    %573 = vmatpush1.xpose.msra.mxu0 0.0
    %574 = vmatprep.subr.mxu0 0.0
    %575 = vmatpush1.xpose.msra.mxu0 0.0
    %576 = vmatprep.subr.mxu0 0.0
    %577 = vmatpush1.xpose.msra.mxu0 0.0
    %578 = vmatprep.subr.mxu0 0.0
    %579 = vmatpush1.xpose.msra.mxu0 0.0
    %580 = vmatprep.subr.mxu0 0.0
    %581 = vmatpush1.xpose.msra.mxu0 0.0
    %582 = vmatprep.subr.mxu0 0.0
    %583 = vmatpush1.xpose.msra.mxu0 0.0
    %584 = vmatprep.subr.mxu0 0.0
    %585 = vmatpush1.xpose.msra.mxu0 0.0
    %586 = vmatprep.subr.mxu0 0.0
    %587 = vmatpush1.xpose.msra.mxu0 0.0
    %588 = vmatprep.subr.mxu0 0.0
    %589 = vmatpush1.xpose.msra.mxu0 0.0
    %590 = vmatprep.subr.mxu0 0.0
    %591 = vmatpush1.xpose.msra.mxu0 0.0
    %592 = vmatprep.subr.mxu0 0.0
    %593 = vmatpush1.xpose.msra.mxu0 0.0
    %594 = vmatprep.subr.mxu0 0.0
    %595 = vmatpush1.xpose.msra.mxu0 0.0
    %596 = vmatprep.subr.mxu0 0.0
    %597 = vmatpush1.xpose.msra.mxu0 0.0
    %598 = vmatprep.subr.mxu0 0.0
    %599 = vmatpush1.xpose.msra.mxu0 0.0
    %600 = vmatprep.subr.mxu0 0.0
    %601 = vmatpush1.xpose.msra.mxu0 0.0
    %602 = vmatprep.subr.mxu0 0.0
    %603 = vmatpush1.xpose.msra.mxu0 0.0
    %604 = vmatprep.subr.mxu0 0.0
    %605 = vmatpush1.xpose.msra.mxu0 0.0
    %606 = vmatprep.subr.mxu0 0.0
    %607 = vmatpush1.xpose.msra.mxu0 0.0
    %608 = vmatprep.subr.mxu0 0.0
    %609 = vmatpush1.xpose.msra.mxu0 0.0
    %610 = vmatprep.subr.mxu0 0.0
    %611 = vmatpush1.xpose.msra.mxu0 0.0
    %612 = vmatprep.subr.mxu0 0.0
    %613 = vmatpush1.xpose.msra.mxu0 0.0
    %614 = vmatprep.subr.mxu0 0.0
    %615 = vmatpush1.xpose.msra.mxu0 0.0
    %616 = vmatprep.mubr.f32.mxu0 0.0
    %617 = vmatmul.mubr.f32.gmra.mrb[0].mxu0 %v548
    %v618 = vpop.f32.mrb[0].mxu0
    %v619 = vadd.f32 0.0, %v618
    %v620 = vpop.f32.mrb[0].mxu0
    %621 = vdwg.mxu0
    %v622 = vmul.f32 %v541, 0.25
    %v623 = vmul.f32 %v619, 0.25
    %v624 = vsel %vm285, %v622, -inf
    %625 = vmax.xlane.f32.xlu0 %v624
    %v626 = vpop.xlane.xlu0 %625
    %v627 = vsel %vm285, %v623, -inf
    %628 = vmax.xlane.f32.xlu0 %v627
    %v629 = vpop.xlane.xlu0 %628
    %v630 = vsub.f32 %v622, %v626
    %v631 = vsub.f32 %v623, %v629
    %v632 = vmul.f32 %v630, 1.442695
    %v633 = vpow.pop %v632
    %v634 = vmul.f32 %v631, 1.442695
    %v635 = vpow.pop %v634
    %v636 = vsel %vm285, %v633, 0.0
    %637 = vadd.xlane.f32.xlu0 %v636
    %v638 = vpop.xlane.xlu0 %637
    %v639 = vsel %vm285, %v635, 0.0
    %640 = vadd.xlane.f32.xlu0 %v639
    %v641 = vpop.xlane.xlu0 %640
    %v642 = vrcp.pop %v638
    %v643 = vrcp.pop %v641
    %v644 = vmul.f32 %v633, %v642
    %v645 = vmul.f32 %v635, %v643
    %646 = vrot.lane.b32.xlu0 %v120, 48
    %v647 = vpop.permute.xlu0 %646
    %649 = vrot.lane.b32.xlu0 %v120, 16
    %v650 = vpop.permute.xlu0 %649
    %v653 = vsel %vm285, %v644, 0
    %655 = vmatprep.subr.mxu0 0.0
    %656 = vmatpush1.msra.mxu0 %v647
    %657 = vmatprep.subr.mxu0 0.0
    %658 = vmatpush1.msra.mxu0 0.0
    %659 = vmatprep.subr.mxu0 0.0
    %660 = vmatpush1.msra.mxu0 0.0
    %661 = vmatprep.subr.mxu0 0.0
    %662 = vmatpush1.msra.mxu0 0.0
    %663 = vmatprep.subr.mxu0 0.0
    %664 = vmatpush1.msra.mxu0 0.0
    %665 = vmatprep.subr.mxu0 0.0
    %666 = vmatpush1.msra.mxu0 0.0
    %667 = vmatprep.subr.mxu0 0.0
    %668 = vmatpush1.msra.mxu0 0.0
    %669 = vmatprep.subr.mxu0 0.0
    %670 = vmatpush1.msra.mxu0 0.0
    %671 = vmatprep.subr.mxu0 0.0
    %672 = vmatpush1.msra.mxu0 0.0
    %673 = vmatprep.subr.mxu0 0.0
    %674 = vmatpush1.msra.mxu0 0.0
    %675 = vmatprep.subr.mxu0 0.0
    %676 = vmatpush1.msra.mxu0 0.0
    %677 = vmatprep.subr.mxu0 0.0
    %678 = vmatpush1.msra.mxu0 0.0
    %679 = vmatprep.subr.mxu0 0.0
    %680 = vmatpush1.msra.mxu0 0.0
    %681 = vmatprep.subr.mxu0 0.0
    %682 = vmatpush1.msra.mxu0 0.0
    %683 = vmatprep.subr.mxu0 0.0
    %684 = vmatpush1.msra.mxu0 0.0
    %685 = vmatprep.subr.mxu0 0.0
    %686 = vmatpush1.msra.mxu0 0.0
    %687 = vmatprep.subr.mxu0 0.0
    %688 = vmatpush1.msra.mxu0 0.0
    %689 = vmatprep.subr.mxu0 0.0
    %690 = vmatpush1.msra.mxu0 0.0
    %691 = vmatprep.subr.mxu0 0.0
    %692 = vmatpush1.msra.mxu0 0.0
    %693 = vmatprep.subr.mxu0 0.0
    %694 = vmatpush1.msra.mxu0 0.0
    %695 = vmatprep.subr.mxu0 0.0
    %696 = vmatpush1.msra.mxu0 0.0
    %697 = vmatprep.subr.mxu0 0.0
    %698 = vmatpush1.msra.mxu0 0.0
    %699 = vmatprep.subr.mxu0 0.0
    %700 = vmatpush1.msra.mxu0 0.0
    %701 = vmatprep.subr.mxu0 0.0
    %702 = vmatpush1.msra.mxu0 0.0
    %703 = vmatprep.subr.mxu0 0.0
    %704 = vmatpush1.msra.mxu0 0.0
    %705 = vmatprep.subr.mxu0 0.0
    %706 = vmatpush1.msra.mxu0 0.0
    %707 = vmatprep.subr.mxu0 0.0
    %708 = vmatpush1.msra.mxu0 0.0
    %709 = vmatprep.subr.mxu0 0.0
    %710 = vmatpush1.msra.mxu0 0.0
    %711 = vmatprep.subr.mxu0 0.0
    %712 = vmatpush1.msra.mxu0 0.0
    %713 = vmatprep.subr.mxu0 0.0
    %714 = vmatpush1.msra.mxu0 0.0
    %715 = vmatprep.subr.mxu0 0.0
    %716 = vmatpush1.msra.mxu0 0.0
    %717 = vmatprep.subr.mxu0 0.0
    %718 = vmatpush1.msra.mxu0 0.0
    %719 = vmatprep.mubr.f32.mxu0 0.0
    %720 = vmatmul.mubr.f32.gmra.mrb[0].mxu0 %v653
    %v721 = vpop.f32.mrb[0].mxu0
    %v722 = vadd.f32 %v650, %v721
    %v723 = vpop.f32.mrb[0].mxu0
    %724 = vdwg.mxu0
    %725 = vrot.lane.b32.xlu0 %v125, 48
    %v726 = vpop.permute.xlu0 %725
    %728 = vrot.lane.b32.xlu0 %v125, 16
    %v729 = vpop.permute.xlu0 %728
    %v732 = vsel %vm285, %v645, 0
    %734 = vmatprep.subr.mxu0 0.0
    %735 = vmatpush1.msra.mxu0 %v726
    %736 = vmatprep.subr.mxu0 0.0
    %737 = vmatpush1.msra.mxu0 0.0
    %738 = vmatprep.subr.mxu0 0.0
    %739 = vmatpush1.msra.mxu0 0.0
    %740 = vmatprep.subr.mxu0 0.0
    %741 = vmatpush1.msra.mxu0 0.0
    %742 = vmatprep.subr.mxu0 0.0
    %743 = vmatpush1.msra.mxu0 0.0
    %744 = vmatprep.subr.mxu0 0.0
    %745 = vmatpush1.msra.mxu0 0.0
    %746 = vmatprep.subr.mxu0 0.0
    %747 = vmatpush1.msra.mxu0 0.0
    %748 = vmatprep.subr.mxu0 0.0
    %749 = vmatpush1.msra.mxu0 0.0
    %750 = vmatprep.subr.mxu0 0.0
    %751 = vmatpush1.msra.mxu0 0.0
    %752 = vmatprep.subr.mxu0 0.0
    %753 = vmatpush1.msra.mxu0 0.0
    %754 = vmatprep.subr.mxu0 0.0
    %755 = vmatpush1.msra.mxu0 0.0
    %756 = vmatprep.subr.mxu0 0.0
    %757 = vmatpush1.msra.mxu0 0.0
    %758 = vmatprep.subr.mxu0 0.0
    %759 = vmatpush1.msra.mxu0 0.0
    %760 = vmatprep.subr.mxu0 0.0
    %761 = vmatpush1.msra.mxu0 0.0
    %762 = vmatprep.subr.mxu0 0.0
    %763 = vmatpush1.msra.mxu0 0.0
    %764 = vmatprep.subr.mxu0 0.0
    %765 = vmatpush1.msra.mxu0 0.0
    %766 = vmatprep.subr.mxu0 0.0
    %767 = vmatpush1.msra.mxu0 0.0
    %768 = vmatprep.subr.mxu0 0.0
    %769 = vmatpush1.msra.mxu0 0.0
    %770 = vmatprep.subr.mxu0 0.0
    %771 = vmatpush1.msra.mxu0 0.0
    %772 = vmatprep.subr.mxu0 0.0
    %773 = vmatpush1.msra.mxu0 0.0
    %774 = vmatprep.subr.mxu0 0.0
    %775 = vmatpush1.msra.mxu0 0.0
    %776 = vmatprep.subr.mxu0 0.0
    %777 = vmatpush1.msra.mxu0 0.0
    %778 = vmatprep.subr.mxu0 0.0
    %779 = vmatpush1.msra.mxu0 0.0
    %780 = vmatprep.subr.mxu0 0.0
    %781 = vmatpush1.msra.mxu0 0.0
    %782 = vmatprep.subr.mxu0 0.0
    %783 = vmatpush1.msra.mxu0 0.0
    %784 = vmatprep.subr.mxu0 0.0
    %785 = vmatpush1.msra.mxu0 0.0
    %786 = vmatprep.subr.mxu0 0.0
    %787 = vmatpush1.msra.mxu0 0.0
    %788 = vmatprep.subr.mxu0 0.0
    %789 = vmatpush1.msra.mxu0 0.0
    %790 = vmatprep.subr.mxu0 0.0
    %791 = vmatpush1.msra.mxu0 0.0
    %792 = vmatprep.subr.mxu0 0.0
    %793 = vmatpush1.msra.mxu0 0.0
    %794 = vmatprep.subr.mxu0 0.0
    %795 = vmatpush1.msra.mxu0 0.0
    %796 = vmatprep.subr.mxu0 0.0
    %797 = vmatpush1.msra.mxu0 0.0
    %798 = vmatprep.mubr.f32.mxu0 0.0
    %799 = vmatmul.mubr.f32.gmra.mrb[0].mxu0 %v732
    %v800 = vpop.f32.mrb[0].mxu0
    %v801 = vadd.f32 %v729, %v800
    %v802 = vpop.f32.mrb[0].mxu0
    %803 = vdwg.mxu0
    %806 = vrot.lane.b32.xlu0 %v722, 16
    %v807 = vpop.permute.xlu0 %806
    %808 = vrot.lane.b32.xlu0 %v801, 16
    %v809 = vpop.permute.xlu0 %808
    %v812 = vsel %vm131, %v384, %v807
    %v813 = vsel %vm131, %v463, %v809
    %814 = vst.msk [vmem:[#allocation7] sm:$0xff] %vm46, %v812
    %815 = vst.msk [vmem:[#allocation7 + $0x8] sm:$0xff] %vm46, %v813
    // Predicated region
    $region18: #{tpu_custom_call.1} parent=1 // pred_check
      _
    $region19: #{tpu_custom_call.1} parent=1 // pred_check_branch
      %817 = sbr.rel (0) target = $region21
    $region20: #{tpu_custom_call.1} parent=1 // pred_region
      %s819 = ssub.s32 256, 256
      %820 = vsyncadd [#allocation4], %s819
      %s821 = sshll.u32 [#allocation7], 4
      %s822 = int_to_ptr.vmem [resolvable:$true] %s821
      %827 = dma.vmem_to_hbm [thread:$0]  %s822, 256, %s2, [#allocation4], 128, 128, 8
    $region21: #{tpu_custom_call.1} parent=1 // pred_fallthru
      _
    // Predicated region
    $region22: #{tpu_custom_call.1} parent=1 // pred_check
      _
    $region23: #{tpu_custom_call.1} parent=1 // pred_check_branch
      %829 = sbr.rel (0) target = $region25
    $region24: #{tpu_custom_call.1} parent=1 // pred_region
      %830 = dma.done [#allocation4], 256
    $region25: #{tpu_custom_call.1} parent=1 // pred_fallthru
      _
    %831 = vsyncpa [#allocation3], 1
    %832 = vsyncpa [#allocation6], 1
    %833 = vsyncpa [#allocation4], 1

</llo_original>
